<compile_context>
chip_gen: v7x
topology: tpu7x:2x2x1
jax: 0.10.0
libtpu: 0.0.40
codegen_flags: <defaults>
</compile_context>

<pallas_src>
import numpy as np
import jax
import jax.numpy as jnp
from jax.experimental import pallas as pl
from jax.experimental.pallas import tpu as pltpu

TN = 128  # rows per tile (multiple of 8); 2 tiles at demo N=256 -> both v7x TCs used


# ----------------------------------------------------------------------------
# Pallas kernels
# ----------------------------------------------------------------------------
def _make_conv_bn_kernel(apply_relu: bool):
    """One N-tile of: (tn, K*Cin) @ (K*Cin, Cout) -> folded-BN epilogue (+ optional ReLU)."""

    def kernel(g_ref, w_ref, scale_ref, shift_ref, o_ref):
        acc = jnp.dot(g_ref[...], w_ref[...], preferred_element_type=jnp.float32)
        y = acc * scale_ref[...] + shift_ref[...]
        if apply_relu:
            y = jnp.maximum(y, 0.0)
        o_ref[...] = y.astype(o_ref.dtype)

    return kernel


def _conv_bn_ds_relu_kernel(g_ref, w_ref, scale_ref, shift_ref,
                            x_ref, wd_ref, scaled_ref, shiftd_ref, o_ref):
    """Second conv + BN fused with the 1x1 downsample conv + BN, residual add and ReLU."""
    acc = jnp.dot(g_ref[...], w_ref[...], preferred_element_type=jnp.float32)
    y = acc * scale_ref[...] + shift_ref[...]
    ds = jnp.dot(x_ref[...], wd_ref[...], preferred_element_type=jnp.float32)
    ds = ds * scaled_ref[...] + shiftd_ref[...]
    o_ref[...] = jnp.maximum(y + ds, 0.0).astype(o_ref.dtype)


def _att_residual_kernel(h2_ref, x_ref, wd_ref, scaled_ref, shiftd_ref,
                         wi_ref, bi_ref, wk_ref, bk_ref, wv_ref, bv_ref,
                         wo_ref, bo_ref, o_ref):
    """MobileViTv2Attention on the full (N, d) block, fused with the 1x1 downsample conv,
    residual add and final ReLU (single block: softmax is over the point axis)."""
    h2 = h2_ref[...]
    logits = jnp.dot(h2, wi_ref[...], preferred_element_type=jnp.float32) + bi_ref[...]
    m = jnp.max(logits, axis=0, keepdims=True)
    e = jnp.exp(logits - m)
    inv = pl.reciprocal(jnp.sum(e, axis=0, keepdims=True), approx=True)
    w_i = e * inv                                                     # softmax over N (dim=0)
    kp = jnp.dot(h2, wk_ref[...], preferred_element_type=jnp.float32) + bk_ref[...]
    ctx = jnp.sum(w_i * kp, axis=0, keepdims=True)                    # (1, d)
    v = (jnp.dot(h2, wv_ref[...], preferred_element_type=jnp.float32) + bv_ref[...]) * ctx
    att = jnp.dot(v, wo_ref[...], preferred_element_type=jnp.float32) + bo_ref[...]
    ds = jnp.dot(x_ref[...], wd_ref[...], preferred_element_type=jnp.float32)
    ds = ds * scaled_ref[...] + shiftd_ref[...]
    o_ref[...] = jnp.maximum(att + ds, 0.0).astype(o_ref.dtype)


# ----------------------------------------------------------------------------
# pallas_call wrappers
# ----------------------------------------------------------------------------
def _pad_rows(a, np_):
    n = a.shape[0]
    if np_ == n:
        return a
    return jnp.pad(a, ((0, np_ - n),) + ((0, 0),) * (a.ndim - 1))


def conv_bn(g_flat, w_flat, scale, shift, *, relu, tn=TN):
    """g_flat: (N, K*Cin) gathered neighbor features (k-major, c-minor, zeros if missing)
       w_flat: (K*Cin, Cout);  scale/shift: (1, Cout) folded BatchNorm params."""
    N, Kc = g_flat.shape
    Cout = w_flat.shape[-1]
    Np = pl.cdiv(N, tn) * tn
    g_flat = _pad_rows(g_flat, Np)

    out = pl.pallas_call(
        _make_conv_bn_kernel(relu),
        out_shape=jax.ShapeDtypeStruct((Np, Cout), jnp.float32),
        grid=(Np // tn,),
        in_specs=[
            pl.BlockSpec((tn, Kc), lambda i: (i, 0)),
            pl.BlockSpec((Kc, Cout), lambda i: (0, 0)),   # constant index -> DMA'd once
            pl.BlockSpec((1, Cout), lambda i: (0, 0)),
            pl.BlockSpec((1, Cout), lambda i: (0, 0)),
        ],
        out_specs=pl.BlockSpec((tn, Cout), lambda i: (i, 0)),
        compiler_params=pltpu.CompilerParams(dimension_semantics=("parallel",)),
    )(g_flat.astype(jnp.bfloat16), w_flat.astype(jnp.bfloat16), scale, shift)
    return out[:N]


def conv_bn_ds_relu(g_flat, w_flat, scale, shift, x, wd_flat, scaled, shiftd, tn=TN):
    """relu( g_flat @ w_flat * scale + shift  +  x @ wd_flat * scaled + shiftd )."""
    N, Kc = g_flat.shape
    Cin = x.shape[-1]
    Cout = w_flat.shape[-1]
    Np = pl.cdiv(N, tn) * tn
    g_flat = _pad_rows(g_flat, Np)
    x = _pad_rows(x, Np)

    out = pl.pallas_call(
        _conv_bn_ds_relu_kernel,
        out_shape=jax.ShapeDtypeStruct((Np, Cout), jnp.float32),
        grid=(Np // tn,),
        in_specs=[
            pl.BlockSpec((tn, Kc), lambda i: (i, 0)),
            pl.BlockSpec((Kc, Cout), lambda i: (0, 0)),
            pl.BlockSpec((1, Cout), lambda i: (0, 0)),
            pl.BlockSpec((1, Cout), lambda i: (0, 0)),
            pl.BlockSpec((tn, Cin), lambda i: (i, 0)),
            pl.BlockSpec((Cin, Cout), lambda i: (0, 0)),
            pl.BlockSpec((1, Cout), lambda i: (0, 0)),
            pl.BlockSpec((1, Cout), lambda i: (0, 0)),
        ],
        out_specs=pl.BlockSpec((tn, Cout), lambda i: (i, 0)),
        compiler_params=pltpu.CompilerParams(dimension_semantics=("parallel",)),
    )(g_flat.astype(jnp.bfloat16), w_flat.astype(jnp.bfloat16), scale, shift,
      x.astype(jnp.bfloat16), wd_flat.astype(jnp.bfloat16), scaled, shiftd)
    return out[:N]


def attention_residual(h2, x, wd_flat, scaled, shiftd, att_params):
    """relu( MobileViTv2Attention(h2) + (x @ wd_flat * scaled + shiftd) )  — single block."""
    N, d = h2.shape
    args = (h2, x, wd_flat, scaled, shiftd) + tuple(att_params)
    return pl.pallas_call(
        _att_residual_kernel,
        out_shape=jax.ShapeDtypeStruct((N, d), jnp.float32),
        grid=(1,),
        in_specs=[pl.BlockSpec(a.shape, lambda i: (0, 0)) for a in args],
        out_specs=pl.BlockSpec((N, d), lambda i: (0, 0)),
    )(*args)


# ----------------------------------------------------------------------------
# Plain-JAX / numpy glue: kernel maps, gather, parameter setup
# ----------------------------------------------------------------------------
def build_kernel_maps(coords, ks=3, dilation=1):
    """coords: (N,3) int numpy, unique. Returns nbr_idx (K, N) int32, -1 = missing."""
    N = coords.shape[0]
    table = {tuple(c): idx for idx, c in enumerate(coords.tolist())}
    half = ks // 2
    offsets = [(dx, dy, dz)
               for dx in range(-half, half + 1)
               for dy in range(-half, half + 1)
               for dz in range(-half, half + 1)]
    K = len(offsets)
    nbr = np.full((K, N), -1, dtype=np.int32)
    for k, (dx, dy, dz) in enumerate(offsets):
        for n in range(N):
            key = (coords[n, 0] + dx * dilation,
                   coords[n, 1] + dy * dilation,
                   coords[n, 2] + dz * dilation)
            nbr[k, n] = table.get(key, -1)
    return nbr


def gather_flat(feats, nbr_idx):
    """Build (N, K*C): row n = concat_k feats[nbr_k(n)] (zeros where missing).
    k-major / c-minor ordering matches W.reshape(K*Cin, Cout)."""
    idx = jnp.asarray(nbr_idx).T                        # (N, K)
    safe = jnp.clip(idx, 0, feats.shape[0] - 1)
    g = jnp.take(feats, safe, axis=0)                   # (N, K, C)
    g = jnp.where((idx >= 0)[..., None], g, 0.0)
    N, K, C = g.shape
    return g.reshape(N, K * C)


def fold_bn(gamma, beta, running_mean, running_var, eps=1e-5):
    scale = gamma / jnp.sqrt(running_var + eps)
    shift = beta - running_mean * scale
    return scale.reshape(1, -1), shift.reshape(1, -1)


def residual_block_forward(feats, nbr_idx, params, att_status):
    K = nbr_idx.shape[0]
    Cin = feats.shape[-1]
    Cout = params["w1"].shape[-1]
    w1_flat = params["w1"].reshape(K * Cin, Cout)
    w2_flat = params["w2"].reshape(K * Cout, Cout)
    wd_flat = params["wd"].reshape(Cin, Cout)

    # net: Conv3d -> BN -> ReLU -> Conv3d -> BN   (+ fused downsample / residual / ReLU)
    g1 = gather_flat(feats, nbr_idx)                    # (N, K*Cin)
    h = conv_bn(g1, w1_flat, params["scale1"], params["shift1"], relu=True)
    g2 = gather_flat(h, nbr_idx)                        # (N, K*Cout)
    if att_status:
        h2 = conv_bn(g2, w2_flat, params["scale2"], params["shift2"], relu=False)
        return attention_residual(h2, feats, wd_flat, params["scaled"], params["shiftd"],
                                  params["att"])
    else:
        return conv_bn_ds_relu(g2, w2_flat, params["scale2"], params["shift2"],
                               feats, wd_flat, params["scaled"], params["shiftd"])


def reference_forward(feats, nbr_idx, params, att_status):
    idx = jnp.asarray(nbr_idx)

    def spconv(f, w):
        s = jnp.clip(idx, 0, f.shape[0] - 1)
        g = jnp.where((idx >= 0)[..., None], f[s], 0.0)
        return jnp.einsum("knc,kcd->nd", g, w)

    h = jax.nn.relu(spconv(feats, params["w1"]) * params["scale1"] + params["shift1"])
    h2 = spconv(h, params["w2"]) * params["scale2"] + params["shift2"]
    ds = (feats @ params["wd"][0]) * params["scaled"] + params["shiftd"]
    if att_status:
        wi, bi, wk, bk, wv, bv, wo, bo = params["att"]
        i = h2 @ wi + bi
        w_i = jax.nn.softmax(i, axis=0)
        ctx = jnp.sum(w_i * (h2 @ wk + bk), axis=0, keepdims=True)
        v = (h2 @ wv + bv) * ctx
        h2 = v @ wo + bo
    return jax.nn.relu(h2 + ds)


# ----------------------------------------------------------------------------
if __name__ == "__main__":
    N, inc, outc, GRID, KS = 256, 8, 16, 16, 3

    key = jax.random.PRNGKey(0)
    ks_ = jax.random.split(key, 24)

    # unique voxel coordinates
    flat = np.asarray(jax.random.choice(ks_[0], GRID * GRID * GRID, shape=(N,), replace=False))
    coords = np.stack(np.unravel_index(flat, (GRID, GRID, GRID)), axis=1).astype(np.int32)
    nbr_idx = build_kernel_maps(coords, ks=KS, dilation=1)          # (27, N)

    feats = jax.random.normal(ks_[1], (N, inc), dtype=jnp.float32)

    # deterministic synthetic parameters
    w1 = 0.1 * jax.random.normal(ks_[2], (27, inc, outc), dtype=jnp.float32)
    w2 = 0.1 * jax.random.normal(ks_[3], (27, outc, outc), dtype=jnp.float32)
    wd = 0.1 * jax.random.normal(ks_[4], (1, inc, outc), dtype=jnp.float32)

    def bn_params(k):
        k1, k2, k3, k4 = jax.random.split(k, 4)
        gamma = jax.random.uniform(k1, (outc,), minval=0.8, maxval=1.2)
        beta = 0.1 * jax.random.normal(k2, (outc,))
        rm = 0.1 * jax.random.normal(k3, (outc,))
        rv = jax.random.uniform(k4, (outc,), minval=0.5, maxval=1.5)
        return fold_bn(gamma, beta, rm, rv)

    scale1, shift1 = bn_params(ks_[5])
    scale2, shift2 = bn_params(ks_[6])
    scaled, shiftd = bn_params(ks_[7])

    # MobileViTv2Attention: Linear weights ~ N(0, 0.001), biases = 0 (per init_weights)
    att = (
        0.001 * jax.random.normal(ks_[8], (outc, 1), dtype=jnp.float32),   # fc_i.weight^T
        jnp.zeros((1, 1), jnp.float32),                                    # fc_i.bias
        0.001 * jax.random.normal(ks_[9], (outc, outc), dtype=jnp.float32),
        jnp.zeros((1, outc), jnp.float32),
        0.001 * jax.random.normal(ks_[10], (outc, outc), dtype=jnp.float32),
        jnp.zeros((1, outc), jnp.float32),
        0.001 * jax.random.normal(ks_[11], (outc, outc), dtype=jnp.float32),
        jnp.zeros((1, outc), jnp.float32),
    )

    params = dict(w1=w1, w2=w2, wd=wd,
                  scale1=scale1, shift1=shift1,
                  scale2=scale2, shift2=shift2,
                  scaled=scaled, shiftd=shiftd,
                  att=att)

    for att_status in (False, True):
        out = residual_block_forward(feats, nbr_idx, params, att_status)
        out = jax.block_until_ready(out)
        ref = jax.block_until_ready(reference_forward(feats, nbr_idx, params, att_status))
        assert out.shape == (N, outc)
        assert bool(jnp.all(jnp.isfinite(out)))
        np.testing.assert_allclose(np.asarray(out), np.asarray(ref), rtol=3e-2, atol=3e-2)

    print("KERNEL_OK")
</pallas_src>

<mosaic_0001>
module attributes {stable_mosaic.version = 11 : i64} {
  func.func @kernel(%arg0: i32, %arg1: memref<128x216xbf16, #tpu.memory_space<vmem>>, %arg2: memref<216x16xbf16, #tpu.memory_space<vmem>>, %arg3: memref<1x16xf32, #tpu.memory_space<vmem>>, %arg4: memref<1x16xf32, #tpu.memory_space<vmem>>, %arg5: memref<128x16xf32, #tpu.memory_space<vmem>>) attributes {dimension_semantics = [#tpu.dimension_semantics<parallel>], iteration_bounds = array<i64: 2>, scalar_prefetch = 0 : i64, scratch_operands = 0 : i64, tpu.core_type = #tpu.core_type<tc>, window_params = [{transform_indices = @transform_0, window_bounds = array<i64: 128, 216>}, {pipeline_mode = #tpu.pipeline_mode<synchronous>, transform_indices = @transform_1, window_bounds = array<i64: 216, 16>}, {pipeline_mode = #tpu.pipeline_mode<synchronous>, transform_indices = @transform_2, window_bounds = array<i64: 1, 16>}, {pipeline_mode = #tpu.pipeline_mode<synchronous>, transform_indices = @transform_3, window_bounds = array<i64: 1, 16>}, {transform_indices = @transform_4, window_bounds = array<i64: 128, 16>}]} {
    %c0 = arith.constant 0 : index
    %c0_0 = arith.constant 0 : index
    %0 = vector.load %arg1[%c0, %c0_0] : memref<128x216xbf16, #tpu.memory_space<vmem>>, vector<128x216xbf16>
    %c0_1 = arith.constant 0 : index
    %c0_2 = arith.constant 0 : index
    %1 = vector.load %arg2[%c0_1, %c0_2] : memref<216x16xbf16, #tpu.memory_space<vmem>>, vector<216x16xbf16>
    %cst = arith.constant dense<0.000000e+00> : vector<128x16xf32>
    %2 = tpu.matmul %0, %1, %cst {dimension_numbers = #tpu.dot_dimension_numbers<[1], [0], [0], [1], [0, 0, 1, 1], [], []>} : vector<128x216xbf16>, vector<216x16xbf16>, vector<128x16xf32> -> vector<128x16xf32>
    %c0_3 = arith.constant 0 : index
    %c0_4 = arith.constant 0 : index
    %3 = vector.load %arg3[%c0_3, %c0_4] : memref<1x16xf32, #tpu.memory_space<vmem>>, vector<1x16xf32>
    %4 = vector.broadcast %3 : vector<1x16xf32> to vector<128x16xf32>
    %5 = arith.mulf %2, %4 : vector<128x16xf32>
    %c0_5 = arith.constant 0 : index
    %c0_6 = arith.constant 0 : index
    %6 = vector.load %arg4[%c0_5, %c0_6] : memref<1x16xf32, #tpu.memory_space<vmem>>, vector<1x16xf32>
    %7 = vector.broadcast %6 : vector<1x16xf32> to vector<128x16xf32>
    %8 = arith.addf %5, %7 : vector<128x16xf32>
    %cst_7 = arith.constant 0.000000e+00 : f32
    %9 = vector.broadcast %cst_7 : f32 to vector<128x16xf32>
    %10 = arith.maximumf %8, %9 : vector<128x16xf32>
    %c0_8 = arith.constant 0 : index
    %c0_9 = arith.constant 0 : index
    %11 = vector.load %arg5[%c0_8, %c0_9] : memref<128x16xf32, #tpu.memory_space<vmem>>, vector<128x16xf32>
    tpu.vector_store %arg5[%c0_8, %c0_9], %10 {strides = array<i32>} : memref<128x16xf32, #tpu.memory_space<vmem>>, vector<128x16xf32>,
    return
  }
  func.func @transform_0(%arg0: i32) -> (i32, i32) {
    %c0_i32 = arith.constant 0 : i32
    %c0_i32_0 = arith.constant 0 : i32
    return %arg0, %c0_i32 : i32, i32
  }
  func.func @transform_1(%arg0: i32) -> (i32, i32) {
    %c0_i32 = arith.constant 0 : i32
    %c0_i32_0 = arith.constant 0 : i32
    %c0_i32_1 = arith.constant 0 : i32
    return %c0_i32, %c0_i32_0 : i32, i32
  }
  func.func @transform_2(%arg0: i32) -> (i32, i32) {
    %c0_i32 = arith.constant 0 : i32
    %c0_i32_0 = arith.constant 0 : i32
    %c0_i32_1 = arith.constant 0 : i32
    return %c0_i32, %c0_i32_0 : i32, i32
  }
  func.func @transform_3(%arg0: i32) -> (i32, i32) {
    %c0_i32 = arith.constant 0 : i32
    %c0_i32_0 = arith.constant 0 : i32
    %c0_i32_1 = arith.constant 0 : i32
    return %c0_i32, %c0_i32_0 : i32, i32
  }
  func.func @transform_4(%arg0: i32) -> (i32, i32) {
    %c0_i32 = arith.constant 0 : i32
    %c0_i32_0 = arith.constant 0 : i32
    return %arg0, %c0_i32 : i32, i32
  }
}

</mosaic_0001>

<llo_original>
// kernel: tpu_custom_call.1
$region0: #{tpu_custom_call.1}
  #allocation0 [shape = 'u32[]', space=smem, size = 0x4, offset = 0x4, fixed_abs, tag = 'smem constant byte address 0x4 - core index']
  #allocation1 [shape = 'u32[144,128]{1,0:T(1,128)}', space=vmem, size = 0x12000, scoped, tag = 'internal scratch']
  %s0 = inlined_call_operand.vmem [shape: bf16[256,216], index: 0, kind: input, shape index: {}]
  %s1 = inlined_call_operand.vmem [shape: bf16[216,16], index: 1, kind: input, shape index: {}]
  %s2 = inlined_call_operand.vmem [shape: f32[1,16], index: 2, kind: input, shape index: {}]
  %s3 = inlined_call_operand.vmem [shape: f32[1,16], index: 3, kind: input, shape index: {}]
  %s4 = inlined_call_operand.vmem [shape: f32[256,16], index: 4, kind: output, shape index: {}]
  %s5 = sld [smem:[#allocation0]]
  $region49: #{tpu_custom_call.1} parent=0
    _
  %s7 = ssub.s32 1, %s5
  %s8 = scalar_select 0, %s7, %s5
  loop: start=0, step=1, limit=4
  $region2: #{tpu_custom_call.1} parent=0 // loop_pre_header
    _
  $region3: #{tpu_custom_call.1} parent=0 // loop_header
    %s10 = sphi 0, %s14
    %p11 = scmp.ge.s32.totalorder %s10, 4
    %s20 = sphi 0, %s22
    %s23 = sphi 0, %s20
    %s24 = sphi 0, %s23
    %s40 = sphi 0, %s24
    %s44 = sphi 0, %s44
    %s46 = sphi 0, %s44
    %s47 = sphi 0, %s46
    %s61 = sphi 0, %s47
    %s65 = sphi 0, %s65
    %s67 = sphi 0, %s65
    %s68 = sphi 0, %s67
    %s82 = sphi 0, %s68
    %s86 = sphi 0, %s86
    %s88 = sphi 0, %s86
    %s89 = sphi 0, %s88
    %s103 = sphi 0, %s89
    %s109 = sphi 0, %s111
    %s112 = sphi 0, %s109
    %s113 = sphi 0, %s112
    %s129 = sphi 0, %s113
  $region4: #{tpu_custom_call.1} parent=0 // loop_header_branch
    %13 = sbr.rel (%p11) target = $region8
  $region5: #{tpu_custom_call.1} parent=0 // loop_body
    %s15 = ssub.s32 %s10, 1
    %s16 = ssub.s32 %s10, 2
    %s17 = sadd.s32 %s10, 1
    %s18 = ssub.s32 %s10, %s17
    %p19 = scmp.eq.s32.totalorder %s18, 0
    %s21 = sadd.s32 %s20, 1
    %s22 = scalar_select %p19, %s20, %s21
    %p25 = pneg %p19
    %p26 = scmp.eq.s32.totalorder %s10, 1
    %p27 = por %p25, %p26
    %p28 = scmp.ne.s32.totalorder %s20, %s23
    %p29 = scmp.eq.s32.totalorder %s10, 0
    %p30 = por %p28, %p29
    %p31 = scmp.ne.s32.totalorder %s20, %s23
    %p32 = scmp.eq.s32.totalorder %s15, 1
    %p33 = por %p31, %p32
    %p34 = scmp.ne.s32.totalorder %s23, %s24
    %p35 = scmp.eq.s32.totalorder %s15, 0
    %p36 = por %p34, %p35
    %p37 = scmp.ne.s32.totalorder %s23, %s24
    %p38 = scmp.eq.s32.totalorder %s16, 1
    %p39 = por %p37, %p38
    %p41 = scmp.ne.s32.totalorder %s24, %s40
    %p42 = scmp.eq.s32.totalorder %s16, 0
    %p43 = por %p41, %p42
    %s45 = sadd.s32 %s44, 1
    %p48 = scmp.eq.s32.totalorder %s10, 1
    %p49 = scmp.ne.s32.totalorder %s44, %s46
    %p50 = scmp.eq.s32.totalorder %s10, 0
    %p51 = por %p49, %p50
    %p52 = scmp.ne.s32.totalorder %s44, %s46
    %p53 = scmp.eq.s32.totalorder %s15, 1
    %p54 = por %p52, %p53
    %p55 = scmp.ne.s32.totalorder %s46, %s47
    %p56 = scmp.eq.s32.totalorder %s15, 0
    %p57 = por %p55, %p56
    %p58 = scmp.ne.s32.totalorder %s46, %s47
    %p59 = scmp.eq.s32.totalorder %s16, 1
    %p60 = por %p58, %p59
    %p62 = scmp.ne.s32.totalorder %s47, %s61
    %p63 = scmp.eq.s32.totalorder %s16, 0
    %p64 = por %p62, %p63
    %s66 = sadd.s32 %s65, 1
    %p69 = scmp.eq.s32.totalorder %s10, 1
    %p70 = scmp.ne.s32.totalorder %s65, %s67
    %p71 = scmp.eq.s32.totalorder %s10, 0
    %p72 = por %p70, %p71
    %p73 = scmp.ne.s32.totalorder %s65, %s67
    %p74 = scmp.eq.s32.totalorder %s15, 1
    %p75 = por %p73, %p74
    %p76 = scmp.ne.s32.totalorder %s67, %s68
    %p77 = scmp.eq.s32.totalorder %s15, 0
    %p78 = por %p76, %p77
    %p79 = scmp.ne.s32.totalorder %s67, %s68
    %p80 = scmp.eq.s32.totalorder %s16, 1
    %p81 = por %p79, %p80
    %p83 = scmp.ne.s32.totalorder %s68, %s82
    %p84 = scmp.eq.s32.totalorder %s16, 0
    %p85 = por %p83, %p84
    %s87 = sadd.s32 %s86, 1
    %p90 = scmp.eq.s32.totalorder %s10, 1
    %p91 = scmp.ne.s32.totalorder %s86, %s88
    %p92 = scmp.eq.s32.totalorder %s10, 0
    %p93 = por %p91, %p92
    %p94 = scmp.ne.s32.totalorder %s86, %s88
    %p95 = scmp.eq.s32.totalorder %s15, 1
    %p96 = por %p94, %p95
    %p97 = scmp.ne.s32.totalorder %s88, %s89
    %p98 = scmp.eq.s32.totalorder %s15, 0
    %p99 = por %p97, %p98
    %p100 = scmp.ne.s32.totalorder %s88, %s89
    %p101 = scmp.eq.s32.totalorder %s16, 1
    %p102 = por %p100, %p101
    %p104 = scmp.ne.s32.totalorder %s89, %s103
    %p105 = scmp.eq.s32.totalorder %s16, 0
    %p106 = por %p104, %p105
    %s107 = ssub.s32 %s10, %s17
    %p108 = scmp.eq.s32.totalorder %s107, 0
    %s110 = sadd.s32 %s109, 1
    %s111 = scalar_select %p108, %s109, %s110
    %p114 = pneg %p108
    %p115 = scmp.eq.s32.totalorder %s10, 1
    %p116 = por %p114, %p115
    %p117 = scmp.ne.s32.totalorder %s109, %s112
    %p118 = scmp.eq.s32.totalorder %s10, 0
    %p119 = por %p117, %p118
    %p120 = scmp.ne.s32.totalorder %s109, %s112
    %p121 = scmp.eq.s32.totalorder %s15, 1
    %p122 = por %p120, %p121
    %p123 = scmp.ne.s32.totalorder %s112, %s113
    %p124 = scmp.eq.s32.totalorder %s15, 0
    %p125 = por %p123, %p124
    %p126 = scmp.ne.s32.totalorder %s112, %s113
    %p127 = scmp.eq.s32.totalorder %s16, 1
    %p128 = por %p126, %p127
    %p130 = scmp.ne.s32.totalorder %s113, %s129
    %p131 = scmp.eq.s32.totalorder %s16, 0
    %p132 = por %p130, %p131
    %p133 = scmp.le.s32.totalorder 1, %s10
    %p134 = scmp.lt.s32.totalorder %s10, 3
    %p135 = pnand %p133, %p134
    %p136 = pneg %p135
    // Predicated region
    $region9: #{tpu_custom_call.1} parent=5 // pred_check
      _
    $region10: #{tpu_custom_call.1} parent=5 // pred_check_branch
      %138 = sbr.rel (%p135) target = $region12
    $region11: #{tpu_custom_call.1} parent=5 // pred_region
      %s139 = ssub.s32 %s10, 1
      // Predicated region
      $region13: #{tpu_custom_call.1} parent=11 // pred_check
        %p140 = pneg %p57
      $region14: #{tpu_custom_call.1} parent=11 // pred_check_branch
        %142 = sbr.rel (%p140) target = $region16
      $region15: #{tpu_custom_call.1} parent=11 // pred_region
        _
      $region16: #{tpu_custom_call.1} parent=11 // pred_fallthru
        _
      // Predicated region
      $region17: #{tpu_custom_call.1} parent=11 // pred_check
        %p143 = pneg %p78
      $region18: #{tpu_custom_call.1} parent=11 // pred_check_branch
        %145 = sbr.rel (%p143) target = $region20
      $region19: #{tpu_custom_call.1} parent=11 // pred_region
        _
      $region20: #{tpu_custom_call.1} parent=11 // pred_fallthru
        _
      // Predicated region
      $region21: #{tpu_custom_call.1} parent=11 // pred_check
        %p146 = pneg %p99
      $region22: #{tpu_custom_call.1} parent=11 // pred_check_branch
        %148 = sbr.rel (%p146) target = $region24
      $region23: #{tpu_custom_call.1} parent=11 // pred_region
        _
      $region24: #{tpu_custom_call.1} parent=11 // pred_fallthru
        _
    $region12: #{tpu_custom_call.1} parent=5 // pred_fallthru
      _
    %p149 = scmp.lt.s32.totalorder %s10, 2
    // Predicated region
    $region25: #{tpu_custom_call.1} parent=5 // pred_check
      %p150 = pneg %p149
    $region26: #{tpu_custom_call.1} parent=5 // pred_check_branch
      %152 = sbr.rel (%p150) target = $region28
    $region27: #{tpu_custom_call.1} parent=5 // pred_region
      // Predicated region
      $region29: #{tpu_custom_call.1} parent=27 // pred_check
        %p153 = pneg %p30
      $region30: #{tpu_custom_call.1} parent=27 // pred_check_branch
        %155 = sbr.rel (%p153) target = $region32
      $region31: #{tpu_custom_call.1} parent=27 // pred_region
        %s156 = smul.u32 16, %s10
        %p157 = scmp.lt.s32.totalorder %s156, 31
        %s158 = scalar_select %p157, %s156, 31
        %s159 = smul.addr %s158, 2
        %s160 = smul.addr %s159, 4
        %s161 = scalar_lea.vmem %s0, %s160
        %s162 = smul.u32 16, %s10
      $region32: #{tpu_custom_call.1} parent=27 // pred_fallthru
        _
    $region28: #{tpu_custom_call.1} parent=5 // pred_fallthru
      _
    %p163 = scmp.le.s32.totalorder 1, %s10
    %p164 = scmp.lt.s32.totalorder %s10, 3
    %p165 = pnand %p163, %p164
    %p166 = pneg %p165
    // Predicated region
    $region33: #{tpu_custom_call.1} parent=5 // pred_check
      _
    $region34: #{tpu_custom_call.1} parent=5 // pred_check_branch
      %168 = sbr.rel (%p165) target = $region36
    $region35: #{tpu_custom_call.1} parent=5 // pred_region
      %s169 = ssub.s32 %s10, 1
      %s170 = smul.u32 16, %s15
      %p171 = scmp.lt.s32.totalorder %s170, 31
      %s172 = scalar_select %p171, %s170, 31
      %s173 = smul.addr %s172, 2
      %s174 = smul.addr %s173, 4
      %s175 = scalar_lea.vmem %s0, %s174
      %p176 = pneg %p36
      %p177 = pneg %p33
      %p178 = pneg %p57
      %p179 = pneg %p54
      %p180 = pneg %p78
      %p181 = pneg %p75
      %p182 = pneg %p99
      %p183 = pneg %p96
      %p184 = pneg %p125
      %p185 = pneg %p122
      %s186 = smul.u32 16, %s15
      %p187 = scmp.lt.s32.totalorder %s186, 31
      %s188 = scalar_select %p187, %s186, 31
      %s189 = smul.addr %s188, 8
      %s190 = scalar_lea.vmem %s4, %s189
      %s191 = smul.u32 16, %s15
      %p192 = scmp.lt.s32.totalorder %s191, 31
      %s193 = scalar_select %p192, %s191, 31
      %s194 = smul.addr %s193, 2
      %s195 = smul.addr %s194, 4
      %s196 = scalar_lea.vmem %s0, %s195
      %s197 = smul.u32 16, %s15
      %s198 = smul.u32 16, %s15
      %p199 = scmp.lt.s32.totalorder %s198, 31
      %s200 = scalar_select %p199, %s198, 31
      %s201 = smul.addr %s200, 8
      %s202 = scalar_lea.vmem %s4, %s201
      %s203 = smul.u32 16, %s15
      %v205 = vld [vmem:[%s196] sm:$0xff]
      %v206 = vld [vmem:[%s196 + $0x8] sm:$0xff]
      %v207 = vld [vmem:[%s196 + $0x10] sm:$0xff]
      %v208 = vld [vmem:[%s196 + $0x18] sm:$0xff]
      %v209 = vld [vmem:[%s196 + $0x20] sm:$0xff]
      %v210 = vld [vmem:[%s196 + $0x28] sm:$0xff]
      %v211 = vld [vmem:[%s196 + $0x30] sm:$0xff]
      %v212 = vld [vmem:[%s196 + $0x38] sm:$0xff]
      %v213 = vld [vmem:[%s196 + $0x40] sm:$0xff]
      %v214 = vld [vmem:[%s196 + $0x48] sm:$0xff]
      %v215 = vld [vmem:[%s196 + $0x50] sm:$0xff]
      %v216 = vld [vmem:[%s196 + $0x58] sm:$0xff]
      %v217 = vld [vmem:[%s196 + $0x60] sm:$0xff]
      %v218 = vld [vmem:[%s196 + $0x68] sm:$0xff]
      %v219 = vld [vmem:[%s196 + $0x70] sm:$0xff]
      %v220 = vld [vmem:[%s196 + $0x78] sm:$0xff]
      %v221 = vld [vmem:[%s1] sm:$0xf]
      %v222 = vld [vmem:[%s1 + $0x4] sm:$0xf]
      %v223 = vld [vmem:[%s1 + $0x8] sm:$0xf]
      %v224 = vld [vmem:[%s1 + $0xc] sm:$0xf]
      %v225 = vld [vmem:[%s1 + $0x10] sm:$0xf]
      %v226 = vld [vmem:[%s1 + $0x14] sm:$0xf]
      %v227 = vld [vmem:[%s1 + $0x18] sm:$0xf]
      %v228 = vld [vmem:[%s1 + $0x1c] sm:$0xf]
      %v229 = vld [vmem:[%s1 + $0x20] sm:$0xf]
      %v230 = vld [vmem:[%s1 + $0x24] sm:$0xf]
      %v231 = vld [vmem:[%s1 + $0x28] sm:$0xf]
      %v232 = vld [vmem:[%s1 + $0x2c] sm:$0xf]
      %v233 = vld [vmem:[%s1 + $0x30] sm:$0xf]
      %v234 = vld [vmem:[%s1 + $0x34] sm:$0xf]
      %v235 = vld [vmem:[%s1 + $0x38] sm:$0xf]
      %v236 = vld [vmem:[%s1 + $0x3c] sm:$0xf]
      %v237 = vld [vmem:[%s1 + $0x40] sm:$0xf]
      %v238 = vld [vmem:[%s1 + $0x44] sm:$0xf]
      %v239 = vld [vmem:[%s1 + $0x48] sm:$0xf]
      %v240 = vld [vmem:[%s1 + $0x4c] sm:$0xf]
      %v241 = vld [vmem:[%s1 + $0x50] sm:$0xf]
      %v242 = vld [vmem:[%s1 + $0x54] sm:$0xf]
      %v243 = vld [vmem:[%s1 + $0x58] sm:$0xf]
      %v244 = vld [vmem:[%s1 + $0x5c] sm:$0xf]
      %v245 = vld [vmem:[%s1 + $0x60] sm:$0xf]
      %v246 = vld [vmem:[%s1 + $0x64] sm:$0xf]
      %v247 = vld [vmem:[%s1 + $0x68] sm:$0xf]
      %v264 = vunpack.c.l.b16 %v205
      %v265 = vunpack.c.h.b16 %v205
      %v266 = vunpack.c.l.b16 %v206
      %v267 = vunpack.c.h.b16 %v206
      %v268 = vunpack.c.l.b16 %v207
      %v269 = vunpack.c.h.b16 %v207
      %v270 = vunpack.c.l.b16 %v208
      %v271 = vunpack.c.h.b16 %v208
      %v272 = vunpack.c.l.b16 %v209
      %v273 = vunpack.c.h.b16 %v209
      %v274 = vunpack.c.l.b16 %v210
      %v275 = vunpack.c.h.b16 %v210
      %v276 = vunpack.c.l.b16 %v211
      %v277 = vunpack.c.h.b16 %v211
      %v278 = vunpack.c.l.b16 %v212
      %v279 = vunpack.c.h.b16 %v212
      %v280 = vunpack.c.l.b16 %v213
      %v281 = vunpack.c.h.b16 %v213
      %v282 = vunpack.c.l.b16 %v214
      %v283 = vunpack.c.h.b16 %v214
      %v284 = vunpack.c.l.b16 %v215
      %v285 = vunpack.c.h.b16 %v215
      %v286 = vunpack.c.l.b16 %v216
      %v287 = vunpack.c.h.b16 %v216
      %v288 = vunpack.c.l.b16 %v217
      %v289 = vunpack.c.h.b16 %v217
      %v290 = vunpack.c.l.b16 %v218
      %v291 = vunpack.c.h.b16 %v218
      %v292 = vunpack.c.l.b16 %v219
      %v293 = vunpack.c.h.b16 %v219
      %v294 = vunpack.c.l.b16 %v220
      %v295 = vunpack.c.h.b16 %v220
      %v296 = vpack.c.b16 %v266, %v264
      %v297 = vpack.c.b16 %v267, %v265
      %v298 = vpack.c.b16 %v270, %v268
      %v299 = vpack.c.b16 %v271, %v269
      %v300 = vpack.c.b16 %v274, %v272
      %v301 = vpack.c.b16 %v275, %v273
      %v302 = vpack.c.b16 %v278, %v276
      %v303 = vpack.c.b16 %v279, %v277
      %v304 = vpack.c.b16 %v282, %v280
      %v305 = vpack.c.b16 %v283, %v281
      %v306 = vpack.c.b16 %v286, %v284
      %v307 = vpack.c.b16 %v287, %v285
      %v308 = vpack.c.b16 %v290, %v288
      %v309 = vpack.c.b16 %v291, %v289
      %v310 = vpack.c.b16 %v294, %v292
      %v311 = vpack.c.b16 %v295, %v293
      %v347 = vunpack.c.l.b16 %v221
      %v348 = vunpack.c.l.b16 %v222
      %v349 = vunpack.c.l.b16 %v223
      %v350 = vunpack.c.l.b16 %v224
      %v351 = vunpack.c.l.b16 %v225
      %v352 = vunpack.c.l.b16 %v226
      %v353 = vunpack.c.l.b16 %v227
      %v354 = vunpack.c.l.b16 %v228
      %v355 = vunpack.c.l.b16 %v229
      %v356 = vunpack.c.l.b16 %v230
      %v357 = vunpack.c.l.b16 %v231
      %v358 = vunpack.c.l.b16 %v232
      %v359 = vunpack.c.l.b16 %v233
      %v360 = vunpack.c.l.b16 %v234
      %v361 = vunpack.c.l.b16 %v235
      %v362 = vunpack.c.l.b16 %v236
      %v363 = vunpack.c.l.b16 %v237
      %v364 = vunpack.c.l.b16 %v238
      %v365 = vunpack.c.l.b16 %v239
      %v366 = vunpack.c.l.b16 %v240
      %v367 = vunpack.c.l.b16 %v241
      %v368 = vunpack.c.l.b16 %v242
      %v369 = vunpack.c.l.b16 %v243
      %v370 = vunpack.c.l.b16 %v244
      %v371 = vunpack.c.l.b16 %v245
      %v372 = vunpack.c.l.b16 %v246
      %v373 = vunpack.c.l.b16 %v247
      %v374 = vpack.c.b16 %v348, %v347
      %v375 = vpack.c.b16 %v350, %v349
      %v376 = vpack.c.b16 %v352, %v351
      %v377 = vpack.c.b16 %v354, %v353
      %v378 = vpack.c.b16 %v356, %v355
      %v379 = vpack.c.b16 %v358, %v357
      %v380 = vpack.c.b16 %v360, %v359
      %v381 = vpack.c.b16 %v362, %v361
      %v382 = vpack.c.b16 %v364, %v363
      %v383 = vpack.c.b16 %v366, %v365
      %v384 = vpack.c.b16 %v368, %v367
      %v385 = vpack.c.b16 %v370, %v369
      %v386 = vpack.c.b16 %v372, %v371
      %v387 = vpack.c.b16 %v373, %v373
      %vm401 = vcmask 719872
      %v403 = vsel %vm401, %v297, 0
      %v406 = vsel %vm401, %v299, 0
      %v409 = vsel %vm401, %v301, 0
      %v412 = vsel %vm401, %v303, 0
      %v415 = vsel %vm401, %v305, 0
      %v418 = vsel %vm401, %v307, 0
      %v421 = vsel %vm401, %v309, 0
      %v424 = vsel %vm401, %v311, 0
      %vm426 = vcmask 1043456
      %v428 = vsel %vm426, %v387, 0
      %430 = vmatprep.subr.bf16.mxu0 0
      %431 = vmatpush1.bf16.msra.mxu0 %v374
      %432 = vmatprep.subr.bf16.mxu0 0
      %433 = vmatpush1.bf16.msra.mxu0 %v375
      %434 = vmatprep.subr.bf16.mxu0 0
      %435 = vmatpush1.bf16.msra.mxu0 %v376
      %436 = vmatprep.subr.bf16.mxu0 0
      %437 = vmatpush1.bf16.msra.mxu0 %v377
      %438 = vmatprep.subr.bf16.mxu0 0
      %439 = vmatpush1.bf16.msra.mxu0 %v378
      %440 = vmatprep.subr.bf16.mxu0 0
      %441 = vmatpush1.bf16.msra.mxu0 %v379
      %442 = vmatprep.subr.bf16.mxu0 0
      %443 = vmatpush1.bf16.msra.mxu0 %v380
      %444 = vmatprep.subr.bf16.mxu0 0
      %445 = vmatpush1.bf16.msra.mxu0 %v381
      %446 = vmatprep.subr.bf16.mxu0 0
      %447 = vmatpush1.bf16.msra.mxu0 %v382
      %448 = vmatprep.subr.bf16.mxu0 0
      %449 = vmatpush1.bf16.msra.mxu0 %v383
      %450 = vmatprep.subr.bf16.mxu0 0
      %451 = vmatpush1.bf16.msra.mxu0 %v384
      %452 = vmatprep.subr.bf16.mxu0 0
      %453 = vmatpush1.bf16.msra.mxu0 %v385
      %454 = vmatprep.subr.bf16.mxu0 0
      %455 = vmatpush1.bf16.msra.mxu0 %v386
      %456 = vmatprep.subr.bf16.mxu0 0
      %457 = vmatpush1.bf16.msra.mxu0 %v428
      %458 = vmatprep.subr.bf16.mxu0 0
      %459 = vmatpush1.bf16.msra.mxu0 0
      %460 = vmatprep.subr.bf16.mxu0 0
      %461 = vmatpush1.bf16.msra.mxu0 0
      %462 = vmatprep.mubr.bf16.mxu0 %v403
      %463 = vmatmul.mubr.bf16.gmra.mrb[0].mxu0 %v296
      %v464 = vpop.f32.mrb[0].mxu0
      %v465 = vadd.f32 0.0, %v464
      %v466 = vpop.f32.mrb[0].mxu0
      %v467 = vpop.f32.mrb[0].mxu0
      %v468 = vadd.f32 0.0, %v467
      %v469 = vpop.f32.mrb[0].mxu0
      %470 = vmatprep.mubr.bf16.mxu0 %v406
      %471 = vmatmul.mubr.bf16.gmra.mrb[0].mxu0 %v298
      %v472 = vpop.f32.mrb[0].mxu0
      %v473 = vadd.f32 0.0, %v472
      %v474 = vpop.f32.mrb[0].mxu0
      %v475 = vpop.f32.mrb[0].mxu0
      %v476 = vadd.f32 0.0, %v475
      %v477 = vpop.f32.mrb[0].mxu0
      %478 = vmatprep.mubr.bf16.mxu0 %v409
      %479 = vmatmul.mubr.bf16.gmra.mrb[0].mxu0 %v300
      %v480 = vpop.f32.mrb[0].mxu0
      %v481 = vadd.f32 0.0, %v480
      %v482 = vpop.f32.mrb[0].mxu0
      %v483 = vpop.f32.mrb[0].mxu0
      %v484 = vadd.f32 0.0, %v483
      %v485 = vpop.f32.mrb[0].mxu0
      %486 = vmatprep.mubr.bf16.mxu0 %v412
      %487 = vmatmul.mubr.bf16.gmra.mrb[0].mxu0 %v302
      %v488 = vpop.f32.mrb[0].mxu0
      %v489 = vadd.f32 0.0, %v488
      %v490 = vpop.f32.mrb[0].mxu0
      %v491 = vpop.f32.mrb[0].mxu0
      %v492 = vadd.f32 0.0, %v491
      %v493 = vpop.f32.mrb[0].mxu0
      %494 = vmatprep.mubr.bf16.mxu0 %v415
      %495 = vmatmul.mubr.bf16.gmra.mrb[0].mxu0 %v304
      %v496 = vpop.f32.mrb[0].mxu0
      %v497 = vadd.f32 0.0, %v496
      %v498 = vpop.f32.mrb[0].mxu0
      %v499 = vpop.f32.mrb[0].mxu0
      %v500 = vadd.f32 0.0, %v499
      %v501 = vpop.f32.mrb[0].mxu0
      %502 = vmatprep.mubr.bf16.mxu0 %v418
      %503 = vmatmul.mubr.bf16.gmra.mrb[0].mxu0 %v306
      %v504 = vpop.f32.mrb[0].mxu0
      %v505 = vadd.f32 0.0, %v504
      %v506 = vpop.f32.mrb[0].mxu0
      %v507 = vpop.f32.mrb[0].mxu0
      %v508 = vadd.f32 0.0, %v507
      %v509 = vpop.f32.mrb[0].mxu0
      %510 = vmatprep.mubr.bf16.mxu0 %v421
      %511 = vmatmul.mubr.bf16.gmra.mrb[0].mxu0 %v308
      %v512 = vpop.f32.mrb[0].mxu0
      %v513 = vadd.f32 0.0, %v512
      %v514 = vpop.f32.mrb[0].mxu0
      %v515 = vpop.f32.mrb[0].mxu0
      %v516 = vadd.f32 0.0, %v515
      %v517 = vpop.f32.mrb[0].mxu0
      %518 = vmatprep.mubr.bf16.mxu0 %v424
      %519 = vmatmul.mubr.bf16.gmra.mrb[0].mxu0 %v310
      %v520 = vpop.f32.mrb[0].mxu0
      %v521 = vadd.f32 0.0, %v520
      %v522 = vpop.f32.mrb[0].mxu0
      %v523 = vpop.f32.mrb[0].mxu0
      %v524 = vadd.f32 0.0, %v523
      %v525 = vpop.f32.mrb[0].mxu0
      %526 = vdwg.mxu0
      %v527 = vld [vmem:[%s2] sm:$0x1]
      %v529 = vlaneseq
      %v530 = vshrl.u32 %v529, 7
      %v531 = vsub.s32 0, %v530
      %v532 = vrot.slane %v527, %v531
      %v534 = vmul.f32 %v465, %v532
      %v535 = vmul.f32 %v468, %v532
      %v536 = vmul.f32 %v473, %v532
      %v537 = vmul.f32 %v476, %v532
      %v538 = vmul.f32 %v481, %v532
      %v539 = vmul.f32 %v484, %v532
      %v540 = vmul.f32 %v489, %v532
      %v541 = vmul.f32 %v492, %v532
      %v542 = vmul.f32 %v497, %v532
      %v543 = vmul.f32 %v500, %v532
      %v544 = vmul.f32 %v505, %v532
      %v545 = vmul.f32 %v508, %v532
      %v546 = vmul.f32 %v513, %v532
      %v547 = vmul.f32 %v516, %v532
      %v548 = vmul.f32 %v521, %v532
      %v549 = vmul.f32 %v524, %v532
      %v550 = vld [vmem:[%s3] sm:$0x1]
      %v552 = vlaneseq
      %v553 = vshrl.u32 %v552, 7
      %v554 = vsub.s32 0, %v553
      %v555 = vrot.slane %v550, %v554
      %v557 = vadd.f32 %v534, %v555
      %v558 = vadd.f32 %v535, %v555
      %v559 = vadd.f32 %v536, %v555
      %v560 = vadd.f32 %v537, %v555
      %v561 = vadd.f32 %v538, %v555
      %v562 = vadd.f32 %v539, %v555
      %v563 = vadd.f32 %v540, %v555
      %v564 = vadd.f32 %v541, %v555
      %v565 = vadd.f32 %v542, %v555
      %v566 = vadd.f32 %v543, %v555
      %v567 = vadd.f32 %v544, %v555
      %v568 = vadd.f32 %v545, %v555
      %v569 = vadd.f32 %v546, %v555
      %v570 = vadd.f32 %v547, %v555
      %v571 = vadd.f32 %v548, %v555
      %v572 = vadd.f32 %v549, %v555
      %v573 = vmax.f32 %v557, 0.0
      %v574 = vmax.f32 %v558, 0.0
      %v575 = vmax.f32 %v559, 0.0
      %v576 = vmax.f32 %v560, 0.0
      %v577 = vmax.f32 %v561, 0.0
      %v578 = vmax.f32 %v562, 0.0
      %v579 = vmax.f32 %v563, 0.0
      %v580 = vmax.f32 %v564, 0.0
      %v581 = vmax.f32 %v565, 0.0
      %v582 = vmax.f32 %v566, 0.0
      %v583 = vmax.f32 %v567, 0.0
      %v584 = vmax.f32 %v568, 0.0
      %v585 = vmax.f32 %v569, 0.0
      %v586 = vmax.f32 %v570, 0.0
      %v587 = vmax.f32 %v571, 0.0
      %v588 = vmax.f32 %v572, 0.0
      %vm589 = vcmask 130048
      %590 = vst.msk [vmem:[%s202] sm:$0xff] %vm589, %v573
      %591 = vst.msk [vmem:[%s202 + $0x8] sm:$0xff] %vm589, %v574
      %592 = vst.msk [vmem:[%s202 + $0x10] sm:$0xff] %vm589, %v575
      %593 = vst.msk [vmem:[%s202 + $0x18] sm:$0xff] %vm589, %v576
      %594 = vst.msk [vmem:[%s202 + $0x20] sm:$0xff] %vm589, %v577
      %595 = vst.msk [vmem:[%s202 + $0x28] sm:$0xff] %vm589, %v578
      %596 = vst.msk [vmem:[%s202 + $0x30] sm:$0xff] %vm589, %v579
      %597 = vst.msk [vmem:[%s202 + $0x38] sm:$0xff] %vm589, %v580
      %598 = vst.msk [vmem:[%s202 + $0x40] sm:$0xff] %vm589, %v581
      %599 = vst.msk [vmem:[%s202 + $0x48] sm:$0xff] %vm589, %v582
      %600 = vst.msk [vmem:[%s202 + $0x50] sm:$0xff] %vm589, %v583
      %601 = vst.msk [vmem:[%s202 + $0x58] sm:$0xff] %vm589, %v584
      %602 = vst.msk [vmem:[%s202 + $0x60] sm:$0xff] %vm589, %v585
      %603 = vst.msk [vmem:[%s202 + $0x68] sm:$0xff] %vm589, %v586
      %604 = vst.msk [vmem:[%s202 + $0x70] sm:$0xff] %vm589, %v587
      %605 = vst.msk [vmem:[%s202 + $0x78] sm:$0xff] %vm589, %v588
      %s606 = smul.u32 16, %s15
      %p607 = scmp.lt.s32.totalorder %s606, 31
      %s608 = scalar_select %p607, %s606, 31
      %s609 = smul.addr %s608, 8
      %s610 = scalar_lea.vmem %s4, %s609
      // Predicated region
      $region37: #{tpu_custom_call.1} parent=35 // pred_check
        %p611 = pneg %p122
      $region38: #{tpu_custom_call.1} parent=35 // pred_check_branch
        %613 = sbr.rel (%p611) target = $region40
      $region39: #{tpu_custom_call.1} parent=35 // pred_region
        %s614 = smul.u32 16, %s15
      $region40: #{tpu_custom_call.1} parent=35 // pred_fallthru
        _
    $region36: #{tpu_custom_call.1} parent=5 // pred_fallthru
      _
    %p615 = scmp.le.s32.totalorder 2, %s10
    // Predicated region
    $region41: #{tpu_custom_call.1} parent=5 // pred_check
      %p616 = pneg %p615
    $region42: #{tpu_custom_call.1} parent=5 // pred_check_branch
      %618 = sbr.rel (%p616) target = $region44
    $region43: #{tpu_custom_call.1} parent=5 // pred_region
      %s619 = ssub.s32 %s10, 2
      // Predicated region
      $region45: #{tpu_custom_call.1} parent=43 // pred_check
        %p620 = pneg %p128
      $region46: #{tpu_custom_call.1} parent=43 // pred_check_branch
        %622 = sbr.rel (%p620) target = $region48
      $region47: #{tpu_custom_call.1} parent=43 // pred_region
        %s623 = smul.u32 16, %s16
        %p624 = scmp.lt.s32.totalorder %s623, 31
        %s625 = scalar_select %p624, %s623, 31
        %s626 = smul.addr %s625, 8
        %s627 = scalar_lea.vmem %s4, %s626
      $region48: #{tpu_custom_call.1} parent=43 // pred_fallthru
        _
    $region44: #{tpu_custom_call.1} parent=5 // pred_fallthru
      _
  $region6: #{tpu_custom_call.1} parent=0 // loop_footer
    %s14 = sadd.s32 1, %s10
  $region7: #{tpu_custom_call.1} parent=0 // loop_footer_branch
    %9 = sbr.rel target = $region3
  $region8: #{tpu_custom_call.1} parent=0 // loop_exit
    _

</llo_original>
